<compile_context>
chip_gen: v5e
topology: v5e:2x2
jax: 0.10.0
libtpu: 0.0.40
codegen_flags: <defaults>
</compile_context>

<pallas_src>
import jax
import jax.numpy as jnp
from jax.experimental import pallas as pl
from jax.experimental.pallas import tpu as pltpu

UNROLL_FOR = 2
NUM_FC = 3

LANE = 128                  # vreg lane width
DEFAULT_TILE_ROWS = 4096    # 4096 x 128 x 4B = 2 MiB per streaming tile
PALLAS_MIN_ELEMS = 65536    # below this, skip Pallas (launch overhead dominates)


def fc_unroll_kernel(w_ref, b_ref, x_ref, out_ref):
    """w_ref/b_ref: SMEM (1,) folded affine scalars; x_ref/out_ref: VMEM tiles."""
    x = x_ref[...].astype(jnp.float32)
    out_ref[...] = (x * w_ref[0] + b_ref[0]).astype(out_ref.dtype)


def _fold_affine(weights, biases):
    """Fold the UNROLL_FOR x NUM_FC Linear(1,1) chain into one (w_eff, b_eff)."""
    w = weights.astype(jnp.float32)
    b = biases.astype(jnp.float32)
    w_eff = jnp.float32(1.0)
    b_eff = jnp.float32(0.0)
    for _ in range(UNROLL_FOR):
        for j in range(NUM_FC):
            w_eff = w_eff * w[j]
            b_eff = b_eff * w[j] + b[j]
    return w_eff, b_eff


def fc_unroll(inputs, labels, weights, biases, *, force_pallas=False):
    """inputs: list/tuple of arrays (only inputs[0] used, shape (B, 1)).
    labels: unused (matches the PyTorch forward signature).
    weights: (NUM_FC,) -- W[i][0,0] of each Linear(1,1)
    biases:  (NUM_FC,) -- b[i][0]   of each Linear(1,1)
    Returns (output, loss); loss is Identity(output), both shape (B, 1).
    """
    x = inputs[0]
    B, F = x.shape
    dtype = x.dtype
    n = B * F

    w_eff, b_eff = _fold_affine(weights, biases)

    # ---- small-batch bypass: at the production shape (B=8) a single fused
    # XLA elementwise FMA beats any kernel launch / repack. ----
    if n < PALLAS_MIN_ELEMS and not force_pallas:
        out = (x.astype(jnp.float32) * w_eff + b_eff).astype(dtype)
        return out, out  # nn.Identity loss -> same array, no extra writeback

    # ---- lane-dense repack: (B, F) -> (rows, 128) slab ----
    flat = x.reshape(-1)
    if n % LANE == 0:
        padded_n = n                            # aligned fast path: no pad
    else:
        padded_n = pl.cdiv(n, LANE) * LANE      # pad only the ragged tail (<128)
        flat = jnp.pad(flat, (0, padded_n - n))
    rows = padded_n // LANE
    slab = flat.reshape(rows, LANE)

    # 2 MiB streaming tiles; when the array is smaller than one tile, use the
    # full-array block (always legal).  Ragged last grid block is masked by
    # Pallas, so no pad-to-tile-multiple is needed.
    tile_rows = min(DEFAULT_TILE_ROWS, rows)
    grid = (pl.cdiv(rows, tile_rows),)

    w_s = jnp.reshape(w_eff, (1,))
    b_s = jnp.reshape(b_eff, (1,))

    out_slab = pl.pallas_call(
        fc_unroll_kernel,
        out_shape=jax.ShapeDtypeStruct((rows, LANE), dtype),
        grid=grid,
        in_specs=[
            pl.BlockSpec(memory_space=pltpu.MemorySpace.SMEM),   # folded weight
            pl.BlockSpec(memory_space=pltpu.MemorySpace.SMEM),   # folded bias
            pl.BlockSpec((tile_rows, LANE), lambda i: (i, 0)),   # x tiles
        ],
        out_specs=pl.BlockSpec((tile_rows, LANE), lambda i: (i, 0)),
        compiler_params=pltpu.CompilerParams(
            dimension_semantics=("parallel",)),
    )(w_s, b_s, slab)

    out_flat = out_slab.reshape(-1)
    if padded_n != n:
        out_flat = out_flat[:n]                 # slice only when we padded
    out = out_flat.reshape(B, F)
    loss = out  # nn.Identity
    return out, loss


def _reference(x, weights, biases):
    out = x.astype(jnp.float32)
    for _ in range(UNROLL_FOR):
        for j in range(NUM_FC):
            out = out * weights[j] + biases[j]
    return out.astype(x.dtype)


def _check(B, key, *, force_pallas=False):
    k_x, k_w, k_b, k_lbl = jax.random.split(key, 4)
    x = jax.random.normal(k_x, (B, 1), dtype=jnp.float32)
    labels = jax.random.normal(k_lbl, (B, 1), dtype=jnp.float32)  # unused
    # PyTorch Linear(1,1) default init: U(-1, 1) since fan_in = 1.
    weights = jax.random.uniform(k_w, (NUM_FC,), jnp.float32, -1.0, 1.0)
    biases = jax.random.uniform(k_b, (NUM_FC,), jnp.float32, -1.0, 1.0)

    out, loss = fc_unroll([x], labels, weights, biases, force_pallas=force_pallas)
    out = jax.block_until_ready(out)
    loss = jax.block_until_ready(loss)

    ref = _reference(x, weights, biases)
    assert out.shape == (B, 1) and loss.shape == (B, 1)
    # Folded (w_eff, b_eff) evaluation is not bit-identical to the sequential
    # 6-step chain; 1e-5 tolerance covers the f32 rounding difference.
    assert jnp.allclose(out, ref, atol=1e-5, rtol=1e-5), f"mismatch at B={B}"
    assert jnp.allclose(loss, ref, atol=1e-5, rtol=1e-5), f"mismatch at B={B}"


if __name__ == "__main__":
    key = jax.random.PRNGKey(0)
    k1, k2, k3 = jax.random.split(key, 3)

    # Production-like tiny shape: fused-XLA bypass path.
    _check(B=8, key=k1)
    # Same tiny shape forced through the Pallas kernel (full-array block, grid=1).
    _check(B=8, key=k1, force_pallas=True)
    # Lane-aligned batch: no pad, no post-kernel slice.
    _check(B=131072, key=k2)
    # Ragged, multi-tile batch: tail pad to 128, 2-step grid, masked last block.
    _check(B=600_000, key=k3)

    print("KERNEL_OK")
</pallas_src>

<mosaic_0001>
module attributes {stable_mosaic.version = 11 : i64} {
  func.func @fc_unroll_kernel(%arg0: i32, %arg1: memref<1xf32, #tpu.memory_space<smem>>, %arg2: memref<1xf32, #tpu.memory_space<smem>>, %arg3: memref<1x128xf32, #tpu.memory_space<vmem>>, %arg4: memref<1x128xf32, #tpu.memory_space<vmem>>) attributes {dimension_semantics = [#tpu.dimension_semantics<parallel>], iteration_bounds = array<i64: 1>, scalar_prefetch = 0 : i64, scratch_operands = 0 : i64, tpu.core_type = #tpu.core_type<tc>, window_params = [{transform_indices = @transform_0, window_bounds = array<i64: 1>}, {transform_indices = @transform_1, window_bounds = array<i64: 1>}, {transform_indices = @transform_2, window_bounds = array<i64: 1, 128>}, {transform_indices = @transform_3, window_bounds = array<i64: 1, 128>}]} {
    %c0 = arith.constant 0 : index
    %c0_0 = arith.constant 0 : index
    %0 = vector.load %arg3[%c0, %c0_0] : memref<1x128xf32, #tpu.memory_space<vmem>>, vector<1x128xf32>
    %c0_1 = arith.constant 0 : index
    %1 = memref.load %arg1[%c0_1] : memref<1xf32, #tpu.memory_space<smem>>
    %2 = vector.broadcast %1 : f32 to vector<1x128xf32>
    %3 = arith.mulf %0, %2 : vector<1x128xf32>
    %c0_2 = arith.constant 0 : index
    %4 = memref.load %arg2[%c0_2] : memref<1xf32, #tpu.memory_space<smem>>
    %5 = vector.broadcast %4 : f32 to vector<1x128xf32>
    %6 = arith.addf %3, %5 : vector<1x128xf32>
    %c0_3 = arith.constant 0 : index
    %c0_4 = arith.constant 0 : index
    %7 = vector.load %arg4[%c0_3, %c0_4] : memref<1x128xf32, #tpu.memory_space<vmem>>, vector<1x128xf32>
    tpu.vector_store %arg4[%c0_3, %c0_4], %6 {strides = array<i32>} : memref<1x128xf32, #tpu.memory_space<vmem>>, vector<1x128xf32>,
    return
  }
  func.func @transform_0(%arg0: i32) -> i32 {
    %c0_i32 = arith.constant 0 : i32
    %c0_i32_0 = arith.constant 0 : i32
    return %c0_i32 : i32
  }
  func.func @transform_1(%arg0: i32) -> i32 {
    %c0_i32 = arith.constant 0 : i32
    %c0_i32_0 = arith.constant 0 : i32
    return %c0_i32 : i32
  }
  func.func @transform_2(%arg0: i32) -> (i32, i32) {
    %c0_i32 = arith.constant 0 : i32
    %c0_i32_0 = arith.constant 0 : i32
    return %arg0, %c0_i32 : i32, i32
  }
  func.func @transform_3(%arg0: i32) -> (i32, i32) {
    %c0_i32 = arith.constant 0 : i32
    %c0_i32_0 = arith.constant 0 : i32
    return %arg0, %c0_i32 : i32, i32
  }
}

</mosaic_0001>

<llo_original>
// kernel: tpu_custom_call.1
$region0: #{tpu_custom_call.1}
  #allocation0 [shape = 'u32[]', space=smem, size = 0x4, offset = 0x4, fixed_abs, tag = 'smem constant byte address 0x4 - core index']
  #allocation1 [shape = 'u32[72,128]{1,0:T(1,128)}', space=vmem, size = 0x9000, scoped, tag = 'internal scratch']
  #allocation2 [shape = 'f32[1]{0:T(128)S(6)}', space=smem, size = 0x200, scoped, tag = 'scoped memory for tpu_custom_call.1']
  #allocation3 [shape = 'f32[1]{0:T(128)S(6)}', space=smem, size = 0x200, scoped, tag = 'scoped memory for tpu_custom_call.1']
  %s0 = inlined_call_operand.<no memory space> [shape: f32[1], index: 0, kind: input, shape index: {}]
  %s1 = inlined_call_operand.<no memory space> [shape: f32[1], index: 1, kind: input, shape index: {}]
  %s2 = inlined_call_operand.vmem [shape: f32[1,128], index: 2, kind: input, shape index: {}]
  %s3 = inlined_call_operand.hbm [shape: f32[1,128], index: 3, kind: output, shape index: {}]
  %s4 = sld [smem:[#allocation0]]
  $region22: #{tpu_custom_call.1} parent=0
    _
  %s6 = ssub.s32 1, %s4
  %s7 = scalar_select 0, %s6, %s4
  %8 = sst [smem:[#allocation2]] %s0
  %9 = sst [smem:[#allocation3]] %s1
  $region1: #{tpu_custom_call.1} parent=0
    #allocation4 [shape = 'u8[512]{0}', space=vmem, size = 0x400, scoped, tag = 'output window, operand 0, single buffered']
    #allocation5 [shape = 's32[1]{0}', space=sflag, size = 0x4, scoped, tag = 'scoped memory for tpu_custom_call.1']
    %10 = vsyncpa [#allocation5], 0
    // Predicated region
    $region2: #{tpu_custom_call.1} parent=1 // pred_check
      _
    $region3: #{tpu_custom_call.1} parent=1 // pred_check_branch
      %12 = sbr.rel (0) target = $region5
    $region4: #{tpu_custom_call.1} parent=1 // pred_region
      _
    $region5: #{tpu_custom_call.1} parent=1 // pred_fallthru
      _
    // Predicated region
    $region6: #{tpu_custom_call.1} parent=1 // pred_check
      _
    $region7: #{tpu_custom_call.1} parent=1 // pred_check_branch
      %14 = sbr.rel (0) target = $region9
    $region8: #{tpu_custom_call.1} parent=1 // pred_region
      _
    $region9: #{tpu_custom_call.1} parent=1 // pred_fallthru
      _
    // Predicated region
    $region10: #{tpu_custom_call.1} parent=1 // pred_check
      _
    $region11: #{tpu_custom_call.1} parent=1 // pred_check_branch
      %16 = sbr.rel (0) target = $region13
    $region12: #{tpu_custom_call.1} parent=1 // pred_region
      _
    $region13: #{tpu_custom_call.1} parent=1 // pred_fallthru
      _
    %v17 = vld [vmem:[%s2] sm:$0x1]
    %s18 = sld [smem:[#allocation2]]
    %v19 = vstv %s18
    %v20 = vmul.f32 %v17, %v19
    %s21 = sld [smem:[#allocation3]]
    %v22 = vstv %s21
    %v23 = vadd.f32 %v20, %v22
    %24 = vst [vmem:[#allocation4] sm:$0x1] %v23
    // Predicated region
    $region14: #{tpu_custom_call.1} parent=1 // pred_check
      _
    $region15: #{tpu_custom_call.1} parent=1 // pred_check_branch
      %26 = sbr.rel (0) target = $region17
    $region16: #{tpu_custom_call.1} parent=1 // pred_region
      %28 = vsyncadd [#allocation5], 0
      %s30 = sshll.u32 [#allocation4], 4
      %s31 = int_to_ptr.vmem [resolvable:$true] %s30
      %s32 = sshll.u32 %s3, 4
      %s33 = int_to_ptr.hbm [resolvable:$true] %s32
      %35 = dma.vmem_to_hbm [thread:$0]  %s31, 16, %s33, [#allocation5]
    $region17: #{tpu_custom_call.1} parent=1 // pred_fallthru
      _
    // Predicated region
    $region18: #{tpu_custom_call.1} parent=1 // pred_check
      _
    $region19: #{tpu_custom_call.1} parent=1 // pred_check_branch
      %37 = sbr.rel (0) target = $region21
    $region20: #{tpu_custom_call.1} parent=1 // pred_region
      %39 = dma.done [#allocation5], 16
    $region21: #{tpu_custom_call.1} parent=1 // pred_fallthru
      _
    %40 = vsyncpa [#allocation5], 1

</llo_original>
